<compile_context>
chip_gen: v7x
topology: tpu7x:2x2x1
jax: 0.10.0
libtpu: 0.0.40
codegen_flags: <defaults>
</compile_context>

<pallas_src>
import functools
import math

import numpy as np
import jax
import jax.numpy as jnp
from jax.experimental import pallas as pl
from jax.experimental.pallas import tpu as pltpu


def _cdiv(a, b):
    return -(-a // b)


def _round_down(a, b):
    return (a // b) * b


# ----------------- parameter setup (host-side, mirrors init_kernel) -----------------
def make_synthesis_kernels(frame_len, num_fft, window="sqrt_hann"):
    """Real / imag synthesis kernels of shape (F, fft_size), float32."""
    fft_size = num_fft if num_fft else 2 ** math.ceil(math.log2(frame_len))
    n_bins = fft_size // 2 + 1
    n = jnp.arange(frame_len, dtype=jnp.float32)
    hann = 0.5 * (1.0 - jnp.cos(2.0 * jnp.pi * n / frame_len))   # torch periodic hann
    if window == "sqrt_hann":
        win = jnp.sqrt(hann)
    elif window == "povey":
        win = hann ** 0.85
    else:  # 'hann'
        win = hann
    left = (num_fft - frame_len) // 2
    right = left + (num_fft - frame_len) % 2
    win = jnp.pad(win, (left, right))                            # (fft_size,)
    t_idx = jnp.arange(fft_size, dtype=jnp.float32)[:, None]
    f_idx = jnp.arange(n_bins, dtype=jnp.float32)[None, :]
    ang = 2.0 * jnp.pi * f_idx * t_idx / fft_size
    # torch.fft.rfft(eye)[n, f] = exp(-2*pi*i*f*n/N) -> real = cos, imag = -sin
    k_real = jnp.cos(ang).T * win[None, :]                       # (F, fft_size)
    k_imag = (-jnp.sin(ang)).T * win[None, :]                    # (F, fft_size)
    return k_real.astype(jnp.float32), k_imag.astype(jnp.float32)


def fold_istft_weights(k_real, k_imag, *, n_frames, frame_hop, num_fft,
                       out_cols=None, dtype=jnp.float32):
    """Fold overlap-add + the [pad : 2*pad) output slice into the weights.

    Returns W_fold (real, imag) of shape (F * n_frames, out_cols), row index
    f * n_frames + t, matching the free reshape of a contiguous (N, F, n_frames)
    input to (N, F*n_frames).  out_cols is rounded up to a multiple of 128 so
    output stores are lane-dense; only the first `pad` columns are the real
    output (the tail columns may be incomplete once dead frames are trimmed and
    are discarded by the wrapper).
    """
    F_bins, fft_size = k_real.shape
    pad = num_fft // 2
    if out_cols is None:
        out_cols = max(128, _cdiv(pad, 128) * 128)
    t = jnp.arange(n_frames)[:, None]                 # (T, 1)
    j = jnp.arange(out_cols)[None, :]                 # (1, out_cols)
    k = pad + j - t * frame_hop                       # tap index into the fft window
    valid = (k >= 0) & (k < fft_size)
    k_c = jnp.clip(k, 0, fft_size - 1)
    wr = jnp.where(valid[None], k_real[:, k_c], 0.0)  # (F, T, out_cols)
    wi = jnp.where(valid[None], k_imag[:, k_c], 0.0)
    wr = wr.reshape(F_bins * n_frames, out_cols).astype(dtype)
    wi = wi.reshape(F_bins * n_frames, out_cols).astype(dtype)
    return wr, wi, out_cols


def _default_vmem_limit_bytes():
    # ~half of physical VMEM: 64 MiB on v5e/v6e (128 MiB), 32 MiB on v7x (64 MiB/TC).
    try:
        cap = int(pltpu.get_tpu_info().vmem_capacity_bytes)
    except Exception:
        cap = 64 * 1024 * 1024
    return int(min(64 * 1024 * 1024, cap // 2))


# --------------------------------- kernel ---------------------------------
def _istft_kernel(m_ref, p_ref, wr_ref, wi_ref, o_ref, *, compute_dtype):
    m = m_ref[...]                                        # (block_n, FT) f32
    p = p_ref[...]
    # cos/sin on the EUP in f32; MXU operands cast to compute_dtype (no-op for f32).
    r = (m * jnp.cos(p)).astype(compute_dtype)
    i = (m * jnp.sin(p)).astype(compute_dtype)
    acc = jnp.dot(r, wr_ref[...], preferred_element_type=jnp.float32)
    acc = acc + jnp.dot(i, wi_ref[...], preferred_element_type=jnp.float32)
    o_ref[...] = acc                                      # lane-dense (block_n, out_cols)


# --------------------------------- wrapper ---------------------------------
def istft_pallas(m, p, k_real, k_imag, *, frame_hop, num_fft, squeeze=False,
                 compute_dtype=jnp.float32, vmem_limit_bytes=None,
                 target_block_n=256):
    if m.ndim not in (2, 3) or p.ndim != m.ndim:
        raise RuntimeError(f"Expect 2D/3D tensor, but got {p.ndim}D")
    if m.ndim == 2:
        m, p = m[None], p[None]
    N, F_bins, T = m.shape
    if T < 1:
        raise RuntimeError("iSTFT needs at least one frame")   # real guard (old one was vacuous)
    pad = num_fft // 2

    # ---- dead-frame trimming: only frames with t*hop < 2*pad reach the output window.
    T_c = min(T, _cdiv(2 * pad, frame_hop))
    if T_c < T:
        m = m[:, :, :T_c]
        p = p[:, :, :T_c]
    FT = F_bins * T_c

    # ---- fold overlap-add + output slice into the synthesis weights (host-side).
    wr_fold, wi_fold, out_cols = fold_istft_weights(
        k_real, k_imag, n_frames=T_c, frame_hop=frame_hop, num_fft=num_fft,
        dtype=compute_dtype)

    # (N, F, T_c) -> (N, F*T_c): contiguous-dim collapse (free after the slice copy).
    # 2-D so batch rows map to sublanes: dense layout, no in-kernel squeeze.
    m2 = m.reshape(N, FT).astype(jnp.float32)
    p2 = p.reshape(N, FT).astype(jnp.float32)

    # ---- batch blocking against an explicit VMEM budget.
    if vmem_limit_bytes is None:
        vmem_limit_bytes = _default_vmem_limit_bytes()
    wbytes = np.dtype(compute_dtype).itemsize
    fixed = 2 * 2 * FT * out_cols * wbytes                # wr + wi, double-buffered
    per_row = 2 * 2 * FT * 4 + 2 * out_cols * 4           # m+p dbl-buffered + out dbl-buffered
    budget = (3 * vmem_limit_bytes) // 4
    # Corner case: gigantic FT*out_cols could blow the weight residency; we still
    # clamp to >= 8 rows (weights dominate VMEM then regardless of block_n).
    max_rows = max(8, _round_down(max(0, budget - fixed) // per_row, 8))
    cap = min(target_block_n, max_rows)                   # multiple of 8 (>= 8)
    if N <= cap:
        block_n = N            # single grid step: full-M matmul, no grid overhead, no padding
    else:
        block_n = cap          # >=2 steps only when each still gets a big M block (v7x split
                               # is useful here); ragged last block handled by Pallas masking,
                               # so no jnp.pad HBM copy of m/p.
    num_blocks = _cdiv(N, block_n)

    kernel = functools.partial(_istft_kernel, compute_dtype=compute_dtype)
    out = pl.pallas_call(
        kernel,
        out_shape=jax.ShapeDtypeStruct((N, out_cols), jnp.float32),
        grid=(num_blocks,),
        in_specs=[
            pl.BlockSpec((block_n, FT), lambda b: (b, 0)),
            pl.BlockSpec((block_n, FT), lambda b: (b, 0)),
            pl.BlockSpec((FT, out_cols), lambda b: (0, 0)),   # resident folded weights
            pl.BlockSpec((FT, out_cols), lambda b: (0, 0)),
        ],
        out_specs=pl.BlockSpec((block_n, out_cols), lambda b: (b, 0)),
        compiler_params=pltpu.CompilerParams(
            dimension_semantics=("parallel",),
            vmem_limit_bytes=int(vmem_limit_bytes),
        ),
    )(m2, p2, wr_fold, wi_fold)

    s = out[:, :pad][:, None, :]            # drop lane-pad columns -> (N, 1, pad)
    if squeeze:
        s = jnp.squeeze(s)
    return s


# ------------------------------ pure-JAX reference ------------------------------
def istft_reference(m, p, k_real, k_imag, *, frame_hop, num_fft):
    """Full-f32 reference matching the PyTorch module's forward()."""
    r = m * jnp.cos(p)
    i = m * jnp.sin(p)
    frames = (jnp.einsum("nft,fk->ntk", r, k_real)
              + jnp.einsum("nft,fk->ntk", i, k_imag))    # (N, T, K)
    N, T, K = frames.shape
    S = (T - 1) * frame_hop + K
    s = jnp.zeros((N, S), jnp.float32)
    for t in range(T):
        s = s.at[:, t * frame_hop:t * frame_hop + K].add(frames[:, t])
    pad = num_fft // 2
    return s[:, None, pad:2 * pad]


if __name__ == "__main__":
    # module config: iSTFT(frame_len=128, frame_hop=32, window='sqrt_hann', num_fft=128)
    frame_len, frame_hop, num_fft = 128, 32, 128
    N, T = 2, 8
    F_bins = num_fft // 2 + 1

    key = jax.random.PRNGKey(0)
    k1, k2 = jax.random.split(key)
    m = jax.random.uniform(k1, (N, F_bins, T), jnp.float32)                     # magnitude
    p = jax.random.uniform(k2, (N, F_bins, T), jnp.float32, -math.pi, math.pi)  # phase

    k_real, k_imag = make_synthesis_kernels(frame_len, num_fft, "sqrt_hann")
    # TODO(synk): check_nan() is a host-side runtime assertion on the (deterministic) kernel weights; skipped.

    out = istft_pallas(m, p, k_real, k_imag, frame_hop=frame_hop, num_fft=num_fft)
    out = jax.block_until_ready(out)

    ref = istft_reference(m, p, k_real, k_imag, frame_hop=frame_hop, num_fft=num_fft)
    assert out.shape == (N, 1, num_fft // 2), out.shape
    # f32 operands with f32 accumulation; tolerance kept conservative to cover
    # MXU multi-pass f32 behaviour across chip generations.
    max_err = float(jnp.max(jnp.abs(out - ref)))
    assert jnp.allclose(out, ref, rtol=2e-2, atol=5e-2), max_err
    print("KERNEL_OK")
</pallas_src>

<mosaic_0001>
module attributes {stable_mosaic.version = 11 : i64} {
  func.func @_istft_kernel(%arg0: i32, %arg1: memref<2x260xf32, #tpu.memory_space<vmem>>, %arg2: memref<2x260xf32, #tpu.memory_space<vmem>>, %arg3: memref<260x128xf32, #tpu.memory_space<vmem>>, %arg4: memref<260x128xf32, #tpu.memory_space<vmem>>, %arg5: memref<2x128xf32, #tpu.memory_space<vmem>>) attributes {dimension_semantics = [#tpu.dimension_semantics<parallel>], iteration_bounds = array<i64: 1>, scalar_prefetch = 0 : i64, scratch_operands = 0 : i64, tpu.core_type = #tpu.core_type<tc>, window_params = [{transform_indices = @transform_0, window_bounds = array<i64: 2, 260>}, {transform_indices = @transform_1, window_bounds = array<i64: 2, 260>}, {pipeline_mode = #tpu.pipeline_mode<synchronous>, transform_indices = @transform_2, window_bounds = array<i64: 260, 128>}, {pipeline_mode = #tpu.pipeline_mode<synchronous>, transform_indices = @transform_3, window_bounds = array<i64: 260, 128>}, {transform_indices = @transform_4, window_bounds = array<i64: 2, 128>}]} {
    %c0 = arith.constant 0 : index
    %c0_0 = arith.constant 0 : index
    %0 = vector.load %arg1[%c0, %c0_0] : memref<2x260xf32, #tpu.memory_space<vmem>>, vector<2x260xf32>
    %c0_1 = arith.constant 0 : index
    %c0_2 = arith.constant 0 : index
    %1 = vector.load %arg2[%c0_1, %c0_2] : memref<2x260xf32, #tpu.memory_space<vmem>>, vector<2x260xf32>
    %2 = math.cos %1 : vector<2x260xf32>
    %3 = arith.mulf %0, %2 : vector<2x260xf32>
    %4 = math.sin %1 : vector<2x260xf32>
    %5 = arith.mulf %0, %4 : vector<2x260xf32>
    %c0_3 = arith.constant 0 : index
    %c0_4 = arith.constant 0 : index
    %6 = vector.load %arg3[%c0_3, %c0_4] : memref<260x128xf32, #tpu.memory_space<vmem>>, vector<260x128xf32>
    %cst = arith.constant dense<0.000000e+00> : vector<2x128xf32>
    %7 = tpu.matmul %3, %6, %cst {dimension_numbers = #tpu.dot_dimension_numbers<[1], [0], [0], [1], [0, 0, 1, 1], [], []>} : vector<2x260xf32>, vector<260x128xf32>, vector<2x128xf32> -> vector<2x128xf32>
    %c0_5 = arith.constant 0 : index
    %c0_6 = arith.constant 0 : index
    %8 = vector.load %arg4[%c0_5, %c0_6] : memref<260x128xf32, #tpu.memory_space<vmem>>, vector<260x128xf32>
    %cst_7 = arith.constant dense<0.000000e+00> : vector<2x128xf32>
    %9 = tpu.matmul %5, %8, %cst_7 {dimension_numbers = #tpu.dot_dimension_numbers<[1], [0], [0], [1], [0, 0, 1, 1], [], []>} : vector<2x260xf32>, vector<260x128xf32>, vector<2x128xf32> -> vector<2x128xf32>
    %10 = arith.addf %7, %9 : vector<2x128xf32>
    %c0_8 = arith.constant 0 : index
    %c0_9 = arith.constant 0 : index
    %11 = vector.load %arg5[%c0_8, %c0_9] : memref<2x128xf32, #tpu.memory_space<vmem>>, vector<2x128xf32>
    tpu.vector_store %arg5[%c0_8, %c0_9], %10 {strides = array<i32>} : memref<2x128xf32, #tpu.memory_space<vmem>>, vector<2x128xf32>,
    return
  }
  func.func @transform_0(%arg0: i32) -> (i32, i32) {
    %c0_i32 = arith.constant 0 : i32
    %c0_i32_0 = arith.constant 0 : i32
    return %arg0, %c0_i32 : i32, i32
  }
  func.func @transform_1(%arg0: i32) -> (i32, i32) {
    %c0_i32 = arith.constant 0 : i32
    %c0_i32_0 = arith.constant 0 : i32
    return %arg0, %c0_i32 : i32, i32
  }
  func.func @transform_2(%arg0: i32) -> (i32, i32) {
    %c0_i32 = arith.constant 0 : i32
    %c0_i32_0 = arith.constant 0 : i32
    %c0_i32_1 = arith.constant 0 : i32
    return %c0_i32, %c0_i32_0 : i32, i32
  }
  func.func @transform_3(%arg0: i32) -> (i32, i32) {
    %c0_i32 = arith.constant 0 : i32
    %c0_i32_0 = arith.constant 0 : i32
    %c0_i32_1 = arith.constant 0 : i32
    return %c0_i32, %c0_i32_0 : i32, i32
  }
  func.func @transform_4(%arg0: i32) -> (i32, i32) {
    %c0_i32 = arith.constant 0 : i32
    %c0_i32_0 = arith.constant 0 : i32
    return %arg0, %c0_i32 : i32, i32
  }
}

</mosaic_0001>

<llo_original>
// kernel: tpu_custom_call.1
$region0: #{tpu_custom_call.1}
  #allocation0 [shape = 'u32[]', space=smem, size = 0x4, offset = 0x4, fixed_abs, tag = 'smem constant byte address 0x4 - core index']
  #allocation1 [shape = 'u32[144,128]{1,0:T(1,128)}', space=vmem, size = 0x12000, scoped, tag = 'internal scratch']
  %s0 = inlined_call_operand.hbm [shape: f32[2,260], index: 0, kind: input, shape index: {}]
  %s1 = inlined_call_operand.hbm [shape: f32[2,260], index: 1, kind: input, shape index: {}]
  %s2 = inlined_call_operand.hbm [shape: f32[260,128], index: 2, kind: input, shape index: {}]
  %s3 = inlined_call_operand.hbm [shape: f32[260,128], index: 3, kind: input, shape index: {}]
  %s4 = inlined_call_operand.hbm [shape: f32[2,128], index: 4, kind: output, shape index: {}]
  %s5 = sld [smem:[#allocation0]]
  $region42: #{tpu_custom_call.1} parent=0
    _
  %s7 = ssub.s32 1, %s5
  %s8 = scalar_select 0, %s7, %s5
  $region1: #{tpu_custom_call.1} parent=0
    #allocation2 [shape = 'u8[3072]{0}', space=vmem, size = 0xc00, scoped, tag = 'input window, operand 0, single buffered']
    #allocation3 [shape = 's32[1]{0}', space=sflag, size = 0x4, scoped, tag = 'scoped memory for tpu_custom_call.1']
    #allocation4 [shape = 's32[1]{0}', space=sflag, size = 0x4, scoped, tag = 'scoped memory for tpu_custom_call.1']
    #allocation5 [shape = 'u8[3072]{0}', space=vmem, size = 0xc00, scoped, tag = 'input window, operand 1, single buffered']
    #allocation6 [shape = 's32[1]{0}', space=sflag, size = 0x4, scoped, tag = 'scoped memory for tpu_custom_call.1']
    #allocation7 [shape = 'u8[135168]{0}', space=vmem, size = 0x21000, scoped, tag = 'input window, operand 2, single buffered']
    #allocation8 [shape = 'u8[135168]{0}', space=vmem, size = 0x21000, scoped, tag = 'input window, operand 3, single buffered']
    #allocation9 [shape = 's32[1]{0}', space=sflag, size = 0x4, scoped, tag = 'scoped memory for tpu_custom_call.1']
    #allocation10 [shape = 'u8[1024]{0}', space=vmem, size = 0x400, scoped, tag = 'output window, operand 0, single buffered']
    %9 = vsyncpa [#allocation3], 0
    %10 = vsyncpa [#allocation6], 0
    %11 = vsyncpa [#allocation9], 0
    %12 = vsyncpa [#allocation4], 0
    // Predicated region
    $region2: #{tpu_custom_call.1} parent=1 // pred_check
      _
    $region3: #{tpu_custom_call.1} parent=1 // pred_check_branch
      %14 = sbr.rel (0) target = $region5
    $region4: #{tpu_custom_call.1} parent=1 // pred_region
      %s16 = ssub.s32 96, 96
      %17 = vsyncadd [#allocation3], %s16
      %s19 = sshll.u32 [#allocation2], 4
      %s20 = int_to_ptr.vmem [resolvable:$true] %s19
      %22 = dma.hbm_to_vmem [thread:$0]  %s0, 96, %s20, [#allocation3]
    $region5: #{tpu_custom_call.1} parent=1 // pred_fallthru
      _
    // Predicated region
    $region6: #{tpu_custom_call.1} parent=1 // pred_check
      _
    $region7: #{tpu_custom_call.1} parent=1 // pred_check_branch
      %24 = sbr.rel (0) target = $region9
    $region8: #{tpu_custom_call.1} parent=1 // pred_region
      %s26 = ssub.s32 96, 96
      %27 = vsyncadd [#allocation6], %s26
      %s29 = sshll.u32 [#allocation5], 4
      %s30 = int_to_ptr.vmem [resolvable:$true] %s29
      %32 = dma.hbm_to_vmem [thread:$0]  %s1, 96, %s30, [#allocation6]
    $region9: #{tpu_custom_call.1} parent=1 // pred_fallthru
      _
    // Predicated region
    $region10: #{tpu_custom_call.1} parent=1 // pred_check
      _
    $region11: #{tpu_custom_call.1} parent=1 // pred_check_branch
      %34 = sbr.rel (0) target = $region13
    $region12: #{tpu_custom_call.1} parent=1 // pred_region
      %s36 = ssub.s32 4224, 4224
      %37 = vsyncadd [#allocation6], %s36
      %s38 = sshll.u32 [#allocation7], 4
      %s39 = int_to_ptr.vmem [resolvable:$true] %s38
      %44 = dma.hbm_to_vmem [thread:$0]  %s2, 4224, %s39, [#allocation6], 128, 128, 8
    $region13: #{tpu_custom_call.1} parent=1 // pred_fallthru
      _
    // Predicated region
    $region14: #{tpu_custom_call.1} parent=1 // pred_check
      _
    $region15: #{tpu_custom_call.1} parent=1 // pred_check_branch
      %46 = sbr.rel (0) target = $region17
    $region16: #{tpu_custom_call.1} parent=1 // pred_region
      %s48 = ssub.s32 4224, 4224
      %49 = vsyncadd [#allocation9], %s48
      %s50 = sshll.u32 [#allocation8], 4
      %s51 = int_to_ptr.vmem [resolvable:$true] %s50
      %56 = dma.hbm_to_vmem [thread:$0]  %s3, 4224, %s51, [#allocation9], 128, 128, 8
    $region17: #{tpu_custom_call.1} parent=1 // pred_fallthru
      _
    // Predicated region
    $region18: #{tpu_custom_call.1} parent=1 // pred_check
      _
    $region19: #{tpu_custom_call.1} parent=1 // pred_check_branch
      %58 = sbr.rel (0) target = $region21
    $region20: #{tpu_custom_call.1} parent=1 // pred_region
      %59 = dma.done [#allocation3], 96
    $region21: #{tpu_custom_call.1} parent=1 // pred_fallthru
      _
    // Predicated region
    $region22: #{tpu_custom_call.1} parent=1 // pred_check
      _
    $region23: #{tpu_custom_call.1} parent=1 // pred_check_branch
      %61 = sbr.rel (0) target = $region25
    $region24: #{tpu_custom_call.1} parent=1 // pred_region
      %62 = dma.done [#allocation6], 96
    $region25: #{tpu_custom_call.1} parent=1 // pred_fallthru
      _
    // Predicated region
    $region26: #{tpu_custom_call.1} parent=1 // pred_check
      _
    $region27: #{tpu_custom_call.1} parent=1 // pred_check_branch
      %64 = sbr.rel (0) target = $region29
    $region28: #{tpu_custom_call.1} parent=1 // pred_region
      %65 = dma.done [#allocation6], 4224
    $region29: #{tpu_custom_call.1} parent=1 // pred_fallthru
      _
    // Predicated region
    $region30: #{tpu_custom_call.1} parent=1 // pred_check
      _
    $region31: #{tpu_custom_call.1} parent=1 // pred_check_branch
      %67 = sbr.rel (0) target = $region33
    $region32: #{tpu_custom_call.1} parent=1 // pred_region
      %68 = dma.done [#allocation9], 4224
    $region33: #{tpu_custom_call.1} parent=1 // pred_fallthru
      _
    %v69 = vld [vmem:[#allocation2] sm:$0x3f]
    %v70 = vld [vmem:[#allocation5] sm:$0x3f]
    %v71 = vand.u32 2147483647, %v70
    %vm72 = vcmp.le.f32.partialorder %v71, 0.7853982
    %vm73 = vcmp.lt.s32.totalorder %v70, 0
    %v74 = vand.u32 %v70, 2139095040
    %v75 = vshrl.u32 %v74, 23
    %v76 = vsub.s32 %v75, 127
    %v77 = vand.u32 2147483647, %v70
    %v78 = vand.u32 %v77, 8388607
    %v79 = vor.u32 %v78, 8388608
    %v80 = vsub.s32 0, %v79
    %v81 = vadd.s32 %v76, 1
    %vm82 = vcmp.gt.s32.totalorder %v81, 0
    %v83 = vsel %vm82, %v81, 0
    %v84 = vshrl.u32 %v83, 5
    %v85 = vand.u32 %v83, 31
    %v86 = vsub.s32 32, %v85
    %v87 = vshrl.u32 683565275, %v86
    %v88 = vshll.u32 683565275, %v85
    %v89 = vshrl.u32 2475754826, %v86
    %v90 = vor.u32 %v88, %v89
    %v91 = vshll.u32 2475754826, %v85
    %v92 = vshrl.u32 2131351028, %v86
    %v93 = vor.u32 %v91, %v92
    %v94 = vshll.u32 2131351028, %v85
    %v95 = vshrl.u32 2102212464, %v86
    %v96 = vor.u32 %v94, %v95
    %v97 = vshll.u32 2102212464, %v85
    %v98 = vshrl.u32 920167782, %v86
    %v99 = vor.u32 %v97, %v98
    %v100 = vshll.u32 920167782, %v85
    %v101 = vshrl.u32 1326507024, %v86
    %v102 = vor.u32 %v100, %v101
    %vm103 = vcmp.lt.s32.totalorder %v84, 1
    %vm104 = vcmp.lt.s32.totalorder %v84, 2
    %vm105 = vcmp.lt.s32.totalorder %v84, 3
    %vm106 = vcmp.lt.s32.totalorder %v84, 4
    %v107 = vsel %vm103, %v87, %v90
    %v108 = vsel %vm106, %v96, 2102212464
    %v109 = vsel %vm105, %v93, %v108
    %v110 = vsel %vm104, %v107, %v109
    %v111 = vsel %vm103, %v90, %v93
    %v112 = vsel %vm106, %v99, 920167782
    %v113 = vsel %vm105, %v96, %v112
    %v114 = vsel %vm104, %v111, %v113
    %v115 = vsel %vm103, %v93, %v96
    %v116 = vsel %vm106, %v102, 1326507024
    %v117 = vsel %vm105, %v99, %v116
    %v118 = vsel %vm104, %v115, %v117
    %v119 = vshll.u32 %v79, 8
    %v120 = vmul.u32.u64.compose %v119, %v118
    %v121 = vextract.low.u32 %v120
    %v122 = vextract.high.u32 %v120
    %v123 = vmul.u32.u64.compose %v119, %v114
    %v124 = vextract.low.u32 %v123
    %v125 = vextract.high.u32 %v123
    %v126 = vmul.u32 %v119, %v110
    %v127 = vadd.s32 %v122, %v124
    %vm128 = vc.u32 %v122, %v124
    %v129 = vadd.s32 %v125, 1
    %v130 = vsel %vm128, %v129, %v125
    %v131 = vadd.s32 %v126, %v130
    %v132 = vadd.s32 %v131, 536870912
    %v133 = vshrl.u32 %v132, 30
    %v134 = vshll.u32 %v133, 30
    %v135 = vsub.s32 %v131, %v134
    %vm136 = vcmp.lt.s32.totalorder %v135, 0
    %v137 = vsub.s32 0, %v135
    %v138 = vsel %vm136, %v137, %v135
    %v139 = vclz %v138
    %v140 = vsub.s32 %v139, 2
    %vm141 = vcmp.gt.s32.totalorder 0, %v140
    %v142 = vsel %vm141, 0, %v140
    %v143 = vsub.s32 32, %v142
    %v144 = vshll.u32 %v135, %v142
    %v145 = vshrl.u32 %v127, %v143
    %v146 = vor.u32 %v144, %v145
    %v147 = vsub.s32 4294967266, %v142
    %v148 = vadd.s32 %v147, 127
    %v149 = vshll.u32 %v148, 23
    %v150 = vor.u32 4788187, %v149
    %v151 = vand.u32 2147483647, %v150
    %v153 = vcvt.s32.f32 %v146
    %v154 = vmul.f32 %v153, %v151
    %v155 = vxor.u32 %v154, 2147483648
    %v156 = vsel %vm73, %v155, %v154
    %v157 = vsub.s32 4, %v133
    %v158 = vsel %vm73, %v157, %v133
    %v159 = vsel %vm72, %v70, %v156
    %v160 = vsel %vm72, 0, %v158
    %v161 = vcosq.f32.pop %v159
    %v162 = vsinq.f32.pop %v159
    %vm163 = vweird.f32 %v70
    %v164 = vand.u32 %v160, 3
    %vm165 = vcmp.lt.s32.totalorder %v164, 2
    %vm166 = vcmp.eq.s32.totalorder %v164, 0
    %v167 = vxor.u32 %v162, 2147483648
    %v168 = vsel %vm166, %v161, %v167
    %vm169 = vcmp.eq.s32.totalorder %v164, 2
    %v170 = vxor.u32 %v161, 2147483648
    %v171 = vsel %vm169, %v170, %v162
    %v172 = vsel %vm165, %v168, %v171
    %v173 = vsel %vm163, nan, %v172
    %v174 = vmul.f32 %v69, %v173
    %v175 = vand.u32 2147483647, %v70
    %vm176 = vcmp.le.f32.partialorder %v175, 0.7853982
    %vm177 = vcmp.lt.s32.totalorder %v70, 0
    %v178 = vand.u32 %v70, 2139095040
    %v179 = vshrl.u32 %v178, 23
    %v180 = vsub.s32 %v179, 127
    %v181 = vand.u32 2147483647, %v70
    %v182 = vand.u32 %v181, 8388607
    %v183 = vor.u32 %v182, 8388608
    %v184 = vsub.s32 0, %v183
    %v185 = vadd.s32 %v180, 1
    %vm186 = vcmp.gt.s32.totalorder %v185, 0
    %v187 = vsel %vm186, %v185, 0
    %v188 = vshrl.u32 %v187, 5
    %v189 = vand.u32 %v187, 31
    %v190 = vsub.s32 32, %v189
    %v191 = vshrl.u32 683565275, %v190
    %v192 = vshll.u32 683565275, %v189
    %v193 = vshrl.u32 2475754826, %v190
    %v194 = vor.u32 %v192, %v193
    %v195 = vshll.u32 2475754826, %v189
    %v196 = vshrl.u32 2131351028, %v190
    %v197 = vor.u32 %v195, %v196
    %v198 = vshll.u32 2131351028, %v189
    %v199 = vshrl.u32 2102212464, %v190
    %v200 = vor.u32 %v198, %v199
    %v201 = vshll.u32 2102212464, %v189
    %v202 = vshrl.u32 920167782, %v190
    %v203 = vor.u32 %v201, %v202
    %v204 = vshll.u32 920167782, %v189
    %v205 = vshrl.u32 1326507024, %v190
    %v206 = vor.u32 %v204, %v205
    %vm207 = vcmp.lt.s32.totalorder %v188, 1
    %vm208 = vcmp.lt.s32.totalorder %v188, 2
    %vm209 = vcmp.lt.s32.totalorder %v188, 3
    %vm210 = vcmp.lt.s32.totalorder %v188, 4
    %v211 = vsel %vm207, %v191, %v194
    %v212 = vsel %vm210, %v200, 2102212464
    %v213 = vsel %vm209, %v197, %v212
    %v214 = vsel %vm208, %v211, %v213
    %v215 = vsel %vm207, %v194, %v197
    %v216 = vsel %vm210, %v203, 920167782
    %v217 = vsel %vm209, %v200, %v216
    %v218 = vsel %vm208, %v215, %v217
    %v219 = vsel %vm207, %v197, %v200
    %v220 = vsel %vm210, %v206, 1326507024
    %v221 = vsel %vm209, %v203, %v220
    %v222 = vsel %vm208, %v219, %v221
    %v223 = vshll.u32 %v183, 8
    %v224 = vmul.u32.u64.compose %v223, %v222
    %v225 = vextract.low.u32 %v224
    %v226 = vextract.high.u32 %v224
    %v227 = vmul.u32.u64.compose %v223, %v218
    %v228 = vextract.low.u32 %v227
    %v229 = vextract.high.u32 %v227
    %v230 = vmul.u32 %v223, %v214
    %v231 = vadd.s32 %v226, %v228
    %vm232 = vc.u32 %v226, %v228
    %v233 = vadd.s32 %v229, 1
    %v234 = vsel %vm232, %v233, %v229
    %v235 = vadd.s32 %v230, %v234
    %v236 = vadd.s32 %v235, 536870912
    %v237 = vshrl.u32 %v236, 30
    %v238 = vshll.u32 %v237, 30
    %v239 = vsub.s32 %v235, %v238
    %vm240 = vcmp.lt.s32.totalorder %v239, 0
    %v241 = vsub.s32 0, %v239
    %v242 = vsel %vm240, %v241, %v239
    %v243 = vclz %v242
    %v244 = vsub.s32 %v243, 2
    %vm245 = vcmp.gt.s32.totalorder 0, %v244
    %v246 = vsel %vm245, 0, %v244
    %v247 = vsub.s32 32, %v246
    %v248 = vshll.u32 %v239, %v246
    %v249 = vshrl.u32 %v231, %v247
    %v250 = vor.u32 %v248, %v249
    %v251 = vsub.s32 4294967266, %v246
    %v252 = vadd.s32 %v251, 127
    %v253 = vshll.u32 %v252, 23
    %v254 = vor.u32 4788187, %v253
    %v255 = vand.u32 2147483647, %v254
    %v257 = vcvt.s32.f32 %v250
    %v258 = vmul.f32 %v257, %v255
    %v259 = vxor.u32 %v258, 2147483648
    %v260 = vsel %vm177, %v259, %v258
    %v261 = vsub.s32 4, %v237
    %v262 = vsel %vm177, %v261, %v237
    %v263 = vsel %vm176, %v70, %v260
    %v264 = vsel %vm176, 0, %v262
    %v265 = vcosq.f32.pop %v263
    %v266 = vsinq.f32.pop %v263
    %vm267 = vweird.f32 %v70
    %v268 = vadd.s32 %v264, 3
    %v269 = vand.u32 %v268, 3
    %vm270 = vcmp.lt.s32.totalorder %v269, 2
    %vm271 = vcmp.eq.s32.totalorder %v269, 0
    %v272 = vxor.u32 %v266, 2147483648
    %v273 = vsel %vm271, %v265, %v272
    %vm274 = vcmp.eq.s32.totalorder %v269, 2
    %v275 = vxor.u32 %v265, 2147483648
    %v276 = vsel %vm274, %v275, %v266
    %v277 = vsel %vm270, %v273, %v276
    %v278 = vsel %vm267, nan, %v277
    %v279 = vmul.f32 %v69, %v278
    %v280 = vld [vmem:[#allocation7] sm:$0xff]
    %v281 = vld [vmem:[#allocation7 + $0x8] sm:$0xff]
    %v282 = vld [vmem:[#allocation7 + $0x10] sm:$0xff]
    %v283 = vld [vmem:[#allocation7 + $0x18] sm:$0xff]
    %v284 = vld [vmem:[#allocation7 + $0x20] sm:$0xff]
    %v285 = vld [vmem:[#allocation7 + $0x28] sm:$0xff]
    %v286 = vld [vmem:[#allocation7 + $0x30] sm:$0xff]
    %v287 = vld [vmem:[#allocation7 + $0x38] sm:$0xff]
    %v288 = vld [vmem:[#allocation7 + $0x40] sm:$0xff]
    %v289 = vld [vmem:[#allocation7 + $0x48] sm:$0xff]
    %v290 = vld [vmem:[#allocation7 + $0x50] sm:$0xff]
    %v291 = vld [vmem:[#allocation7 + $0x58] sm:$0xff]
    %v292 = vld [vmem:[#allocation7 + $0x60] sm:$0xff]
    %v293 = vld [vmem:[#allocation7 + $0x68] sm:$0xff]
    %v294 = vld [vmem:[#allocation7 + $0x70] sm:$0xff]
    %v295 = vld [vmem:[#allocation7 + $0x78] sm:$0xff]
    %v296 = vld [vmem:[#allocation7 + $0x80] sm:$0xff]
    %v297 = vld [vmem:[#allocation7 + $0x88] sm:$0xff]
    %v298 = vld [vmem:[#allocation7 + $0x90] sm:$0xff]
    %v299 = vld [vmem:[#allocation7 + $0x98] sm:$0xff]
    %v300 = vld [vmem:[#allocation7 + $0xa0] sm:$0xff]
    %v301 = vld [vmem:[#allocation7 + $0xa8] sm:$0xff]
    %v302 = vld [vmem:[#allocation7 + $0xb0] sm:$0xff]
    %v303 = vld [vmem:[#allocation7 + $0xb8] sm:$0xff]
    %v304 = vld [vmem:[#allocation7 + $0xc0] sm:$0xff]
    %v305 = vld [vmem:[#allocation7 + $0xc8] sm:$0xff]
    %v306 = vld [vmem:[#allocation7 + $0xd0] sm:$0xff]
    %v307 = vld [vmem:[#allocation7 + $0xd8] sm:$0xff]
    %v308 = vld [vmem:[#allocation7 + $0xe0] sm:$0xff]
    %v309 = vld [vmem:[#allocation7 + $0xe8] sm:$0xff]
    %v310 = vld [vmem:[#allocation7 + $0xf0] sm:$0xff]
    %v311 = vld [vmem:[#allocation7 + $0xf8] sm:$0xff]
    %v312 = vld [vmem:[#allocation7 + $0x100] sm:$0xf]
    %v313 = vld [vmem:[#allocation8] sm:$0xff]
    %v314 = vld [vmem:[#allocation8 + $0x8] sm:$0xff]
    %v315 = vld [vmem:[#allocation8 + $0x10] sm:$0xff]
    %v316 = vld [vmem:[#allocation8 + $0x18] sm:$0xff]
    %v317 = vld [vmem:[#allocation8 + $0x20] sm:$0xff]
    %v318 = vld [vmem:[#allocation8 + $0x28] sm:$0xff]
    %v319 = vld [vmem:[#allocation8 + $0x30] sm:$0xff]
    %v320 = vld [vmem:[#allocation8 + $0x38] sm:$0xff]
    %v321 = vld [vmem:[#allocation8 + $0x40] sm:$0xff]
    %v322 = vld [vmem:[#allocation8 + $0x48] sm:$0xff]
    %v323 = vld [vmem:[#allocation8 + $0x50] sm:$0xff]
    %v324 = vld [vmem:[#allocation8 + $0x58] sm:$0xff]
    %v325 = vld [vmem:[#allocation8 + $0x60] sm:$0xff]
    %v326 = vld [vmem:[#allocation8 + $0x68] sm:$0xff]
    %v327 = vld [vmem:[#allocation8 + $0x70] sm:$0xff]
    %v328 = vld [vmem:[#allocation8 + $0x78] sm:$0xff]
    %v329 = vld [vmem:[#allocation8 + $0x80] sm:$0xff]
    %v330 = vld [vmem:[#allocation8 + $0x88] sm:$0xff]
    %v331 = vld [vmem:[#allocation8 + $0x90] sm:$0xff]
    %v332 = vld [vmem:[#allocation8 + $0x98] sm:$0xff]
    %v333 = vld [vmem:[#allocation8 + $0xa0] sm:$0xff]
    %v334 = vld [vmem:[#allocation8 + $0xa8] sm:$0xff]
    %v335 = vld [vmem:[#allocation8 + $0xb0] sm:$0xff]
    %v336 = vld [vmem:[#allocation8 + $0xb8] sm:$0xff]
    %v337 = vld [vmem:[#allocation8 + $0xc0] sm:$0xff]
    %v338 = vld [vmem:[#allocation8 + $0xc8] sm:$0xff]
    %v339 = vld [vmem:[#allocation8 + $0xd0] sm:$0xff]
    %v340 = vld [vmem:[#allocation8 + $0xd8] sm:$0xff]
    %v341 = vld [vmem:[#allocation8 + $0xe0] sm:$0xff]
    %v342 = vld [vmem:[#allocation8 + $0xe8] sm:$0xff]
    %v343 = vld [vmem:[#allocation8 + $0xf0] sm:$0xff]
    %v344 = vld [vmem:[#allocation8 + $0xf8] sm:$0xff]
    %v345 = vld [vmem:[#allocation8 + $0x100] sm:$0xf]
    %v347 = vcombine.high %v279, %v279
    %v349 = vunpack.c.l.s4 1983009808
    %v350 = vunpack.c.0.s8 %v349
    %v351 = vlaneseq
    %v352 = vshrl.u32 %v351, 7
    %v353 = vsub.s32 %v350, %v352
    %v354 = vrot.slane %v279, %v353
    %v356 = vunpack.c.l.s4 1983009808
    %v357 = vunpack.c.0.s8 %v356
    %v358 = vlaneseq
    %v359 = vshrl.u32 %v358, 7
    %v360 = vsub.s32 %v357, %v359
    %v361 = vrot.slane %v347, %v360
    %v362 = vcombine.high %v354, %v354
    %vm365 = vcmask 31744
    %v366 = vsel %vm365, %v361, 0
    %vm368 = vcmask 1043456
    %v370 = vsel %vm368, %v345, 0
    %372 = vmatprep.subr.mxu0 0.0
    %373 = vmatpush1.msra.mxu0 %v313
    %374 = vmatprep.subr.mxu0 0.0
    %375 = vmatpush1.msra.mxu0 %v314
    %376 = vmatprep.subr.mxu0 0.0
    %377 = vmatpush1.msra.mxu0 %v315
    %378 = vmatprep.subr.mxu0 0.0
    %379 = vmatpush1.msra.mxu0 %v316
    %380 = vmatprep.subr.mxu0 0.0
    %381 = vmatpush1.msra.mxu0 %v317
    %382 = vmatprep.subr.mxu0 0.0
    %383 = vmatpush1.msra.mxu0 %v318
    %384 = vmatprep.subr.mxu0 0.0
    %385 = vmatpush1.msra.mxu0 %v319
    %386 = vmatprep.subr.mxu0 0.0
    %387 = vmatpush1.msra.mxu0 %v320
    %388 = vmatprep.subr.mxu0 0.0
    %389 = vmatpush1.msra.mxu0 %v321
    %390 = vmatprep.subr.mxu0 0.0
    %391 = vmatpush1.msra.mxu0 %v322
    %392 = vmatprep.subr.mxu0 0.0
    %393 = vmatpush1.msra.mxu0 %v323
    %394 = vmatprep.subr.mxu0 0.0
    %395 = vmatpush1.msra.mxu0 %v324
    %396 = vmatprep.subr.mxu0 0.0
    %397 = vmatpush1.msra.mxu0 %v325
    %398 = vmatprep.subr.mxu0 0.0
    %399 = vmatpush1.msra.mxu0 %v326
    %400 = vmatprep.subr.mxu0 0.0
    %401 = vmatpush1.msra.mxu0 %v327
    %402 = vmatprep.subr.mxu0 0.0
    %403 = vmatpush1.msra.mxu0 %v328
    %404 = vmatprep.subr.mxu0 0.0
    %405 = vmatpush1.msra.mxu0 %v329
    %406 = vmatprep.subr.mxu0 0.0
    %407 = vmatpush1.msra.mxu0 %v330
    %408 = vmatprep.subr.mxu0 0.0
    %409 = vmatpush1.msra.mxu0 %v331
    %410 = vmatprep.subr.mxu0 0.0
    %411 = vmatpush1.msra.mxu0 %v332
    %412 = vmatprep.subr.mxu0 0.0
    %413 = vmatpush1.msra.mxu0 %v333
    %414 = vmatprep.subr.mxu0 0.0
    %415 = vmatpush1.msra.mxu0 %v334
    %416 = vmatprep.subr.mxu0 0.0
    %417 = vmatpush1.msra.mxu0 %v335
    %418 = vmatprep.subr.mxu0 0.0
    %419 = vmatpush1.msra.mxu0 %v336
    %420 = vmatprep.subr.mxu0 0.0
    %421 = vmatpush1.msra.mxu0 %v337
    %422 = vmatprep.subr.mxu0 0.0
    %423 = vmatpush1.msra.mxu0 %v338
    %424 = vmatprep.subr.mxu0 0.0
    %425 = vmatpush1.msra.mxu0 %v339
    %426 = vmatprep.subr.mxu0 0.0
    %427 = vmatpush1.msra.mxu0 %v340
    %428 = vmatprep.subr.mxu0 0.0
    %429 = vmatpush1.msra.mxu0 %v341
    %430 = vmatprep.subr.mxu0 0.0
    %431 = vmatpush1.msra.mxu0 %v342
    %432 = vmatprep.subr.mxu0 0.0
    %433 = vmatpush1.msra.mxu0 %v343
    %434 = vmatprep.subr.mxu0 0.0
    %435 = vmatpush1.msra.mxu0 %v344
    %436 = vmatprep.mubr.f32.mxu0 %v362
    %437 = vmatmul.mubr.f32.gmra.mrb[0].mxu0 %v354
    %v438 = vpop.f32.mrb[0].mxu0
    %v439 = vadd.f32 0.0, %v438
    %v440 = vpop.f32.mrb[0].mxu0
    %441 = vdwg.mxu0
    %442 = vmatprep.subr.mxu0 0.0
    %443 = vmatpush1.msra.mxu0 %v370
    %444 = vmatprep.subr.mxu0 0.0
    %445 = vmatpush1.msra.mxu0 0.0
    %446 = vmatprep.subr.mxu0 0.0
    %447 = vmatpush1.msra.mxu0 0.0
    %448 = vmatprep.subr.mxu0 0.0
    %449 = vmatpush1.msra.mxu0 0.0
    %450 = vmatprep.subr.mxu0 0.0
    %451 = vmatpush1.msra.mxu0 0.0
    %452 = vmatprep.subr.mxu0 0.0
    %453 = vmatpush1.msra.mxu0 0.0
    %454 = vmatprep.subr.mxu0 0.0
    %455 = vmatpush1.msra.mxu0 0.0
    %456 = vmatprep.subr.mxu0 0.0
    %457 = vmatpush1.msra.mxu0 0.0
    %458 = vmatprep.subr.mxu0 0.0
    %459 = vmatpush1.msra.mxu0 0.0
    %460 = vmatprep.subr.mxu0 0.0
    %461 = vmatpush1.msra.mxu0 0.0
    %462 = vmatprep.subr.mxu0 0.0
    %463 = vmatpush1.msra.mxu0 0.0
    %464 = vmatprep.subr.mxu0 0.0
    %465 = vmatpush1.msra.mxu0 0.0
    %466 = vmatprep.subr.mxu0 0.0
    %467 = vmatpush1.msra.mxu0 0.0
    %468 = vmatprep.subr.mxu0 0.0
    %469 = vmatpush1.msra.mxu0 0.0
    %470 = vmatprep.subr.mxu0 0.0
    %471 = vmatpush1.msra.mxu0 0.0
    %472 = vmatprep.subr.mxu0 0.0
    %473 = vmatpush1.msra.mxu0 0.0
    %474 = vmatprep.subr.mxu0 0.0
    %475 = vmatpush1.msra.mxu0 0.0
    %476 = vmatprep.subr.mxu0 0.0
    %477 = vmatpush1.msra.mxu0 0.0
    %478 = vmatprep.subr.mxu0 0.0
    %479 = vmatpush1.msra.mxu0 0.0
    %480 = vmatprep.subr.mxu0 0.0
    %481 = vmatpush1.msra.mxu0 0.0
    %482 = vmatprep.subr.mxu0 0.0
    %483 = vmatpush1.msra.mxu0 0.0
    %484 = vmatprep.subr.mxu0 0.0
    %485 = vmatpush1.msra.mxu0 0.0
    %486 = vmatprep.subr.mxu0 0.0
    %487 = vmatpush1.msra.mxu0 0.0
    %488 = vmatprep.subr.mxu0 0.0
    %489 = vmatpush1.msra.mxu0 0.0
    %490 = vmatprep.subr.mxu0 0.0
    %491 = vmatpush1.msra.mxu0 0.0
    %492 = vmatprep.subr.mxu0 0.0
    %493 = vmatpush1.msra.mxu0 0.0
    %494 = vmatprep.subr.mxu0 0.0
    %495 = vmatpush1.msra.mxu0 0.0
    %496 = vmatprep.subr.mxu0 0.0
    %497 = vmatpush1.msra.mxu0 0.0
    %498 = vmatprep.subr.mxu0 0.0
    %499 = vmatpush1.msra.mxu0 0.0
    %500 = vmatprep.subr.mxu0 0.0
    %501 = vmatpush1.msra.mxu0 0.0
    %502 = vmatprep.subr.mxu0 0.0
    %503 = vmatpush1.msra.mxu0 0.0
    %504 = vmatprep.subr.mxu0 0.0
    %505 = vmatpush1.msra.mxu0 0.0
    %506 = vmatprep.mubr.f32.mxu0 0.0
    %507 = vmatmul.mubr.f32.gmra.mrb[0].mxu0 %v366
    %v508 = vpop.f32.mrb[0].mxu0
    %v509 = vadd.f32 %v439, %v508
    %v510 = vpop.f32.mrb[0].mxu0
    %511 = vdwg.mxu0
    %v513 = vcombine.high %v174, %v174
    %v515 = vunpack.c.l.s4 1983009808
    %v516 = vunpack.c.0.s8 %v515
    %v517 = vlaneseq
    %v518 = vshrl.u32 %v517, 7
    %v519 = vsub.s32 %v516, %v518
    %v520 = vrot.slane %v174, %v519
    %v522 = vunpack.c.l.s4 1983009808
    %v523 = vunpack.c.0.s8 %v522
    %v524 = vlaneseq
    %v525 = vshrl.u32 %v524, 7
    %v526 = vsub.s32 %v523, %v525
    %v527 = vrot.slane %v513, %v526
    %v528 = vcombine.high %v520, %v520
    %v531 = vsel %vm365, %v527, 0
    %v534 = vsel %vm368, %v312, 0
    %536 = vmatprep.subr.mxu0 0.0
    %537 = vmatpush1.msra.mxu0 %v280
    %538 = vmatprep.subr.mxu0 0.0
    %539 = vmatpush1.msra.mxu0 %v281
    %540 = vmatprep.subr.mxu0 0.0
    %541 = vmatpush1.msra.mxu0 %v282
    %542 = vmatprep.subr.mxu0 0.0
    %543 = vmatpush1.msra.mxu0 %v283
    %544 = vmatprep.subr.mxu0 0.0
    %545 = vmatpush1.msra.mxu0 %v284
    %546 = vmatprep.subr.mxu0 0.0
    %547 = vmatpush1.msra.mxu0 %v285
    %548 = vmatprep.subr.mxu0 0.0
    %549 = vmatpush1.msra.mxu0 %v286
    %550 = vmatprep.subr.mxu0 0.0
    %551 = vmatpush1.msra.mxu0 %v287
    %552 = vmatprep.subr.mxu0 0.0
    %553 = vmatpush1.msra.mxu0 %v288
    %554 = vmatprep.subr.mxu0 0.0
    %555 = vmatpush1.msra.mxu0 %v289
    %556 = vmatprep.subr.mxu0 0.0
    %557 = vmatpush1.msra.mxu0 %v290
    %558 = vmatprep.subr.mxu0 0.0
    %559 = vmatpush1.msra.mxu0 %v291
    %560 = vmatprep.subr.mxu0 0.0
    %561 = vmatpush1.msra.mxu0 %v292
    %562 = vmatprep.subr.mxu0 0.0
    %563 = vmatpush1.msra.mxu0 %v293
    %564 = vmatprep.subr.mxu0 0.0
    %565 = vmatpush1.msra.mxu0 %v294
    %566 = vmatprep.subr.mxu0 0.0
    %567 = vmatpush1.msra.mxu0 %v295
    %568 = vmatprep.subr.mxu0 0.0
    %569 = vmatpush1.msra.mxu0 %v296
    %570 = vmatprep.subr.mxu0 0.0
    %571 = vmatpush1.msra.mxu0 %v297
    %572 = vmatprep.subr.mxu0 0.0
    %573 = vmatpush1.msra.mxu0 %v298
    %574 = vmatprep.subr.mxu0 0.0
    %575 = vmatpush1.msra.mxu0 %v299
    %576 = vmatprep.subr.mxu0 0.0
    %577 = vmatpush1.msra.mxu0 %v300
    %578 = vmatprep.subr.mxu0 0.0
    %579 = vmatpush1.msra.mxu0 %v301
    %580 = vmatprep.subr.mxu0 0.0
    %581 = vmatpush1.msra.mxu0 %v302
    %582 = vmatprep.subr.mxu0 0.0
    %583 = vmatpush1.msra.mxu0 %v303
    %584 = vmatprep.subr.mxu0 0.0
    %585 = vmatpush1.msra.mxu0 %v304
    %586 = vmatprep.subr.mxu0 0.0
    %587 = vmatpush1.msra.mxu0 %v305
    %588 = vmatprep.subr.mxu0 0.0
    %589 = vmatpush1.msra.mxu0 %v306
    %590 = vmatprep.subr.mxu0 0.0
    %591 = vmatpush1.msra.mxu0 %v307
    %592 = vmatprep.subr.mxu0 0.0
    %593 = vmatpush1.msra.mxu0 %v308
    %594 = vmatprep.subr.mxu0 0.0
    %595 = vmatpush1.msra.mxu0 %v309
    %596 = vmatprep.subr.mxu0 0.0
    %597 = vmatpush1.msra.mxu0 %v310
    %598 = vmatprep.subr.mxu0 0.0
    %599 = vmatpush1.msra.mxu0 %v311
    %600 = vmatprep.mubr.f32.mxu0 %v528
    %601 = vmatmul.mubr.f32.gmra.mrb[0].mxu0 %v520
    %v602 = vpop.f32.mrb[0].mxu0
    %v603 = vadd.f32 %v509, %v602
    %v604 = vpop.f32.mrb[0].mxu0
    %605 = vdwg.mxu0
    %606 = vmatprep.subr.mxu0 0.0
    %607 = vmatpush1.msra.mxu0 %v534
    %608 = vmatprep.subr.mxu0 0.0
    %609 = vmatpush1.msra.mxu0 0.0
    %610 = vmatprep.subr.mxu0 0.0
    %611 = vmatpush1.msra.mxu0 0.0
    %612 = vmatprep.subr.mxu0 0.0
    %613 = vmatpush1.msra.mxu0 0.0
    %614 = vmatprep.subr.mxu0 0.0
    %615 = vmatpush1.msra.mxu0 0.0
    %616 = vmatprep.subr.mxu0 0.0
    %617 = vmatpush1.msra.mxu0 0.0
    %618 = vmatprep.subr.mxu0 0.0
    %619 = vmatpush1.msra.mxu0 0.0
    %620 = vmatprep.subr.mxu0 0.0
    %621 = vmatpush1.msra.mxu0 0.0
    %622 = vmatprep.subr.mxu0 0.0
    %623 = vmatpush1.msra.mxu0 0.0
    %624 = vmatprep.subr.mxu0 0.0
    %625 = vmatpush1.msra.mxu0 0.0
    %626 = vmatprep.subr.mxu0 0.0
    %627 = vmatpush1.msra.mxu0 0.0
    %628 = vmatprep.subr.mxu0 0.0
    %629 = vmatpush1.msra.mxu0 0.0
    %630 = vmatprep.subr.mxu0 0.0
    %631 = vmatpush1.msra.mxu0 0.0
    %632 = vmatprep.subr.mxu0 0.0
    %633 = vmatpush1.msra.mxu0 0.0
    %634 = vmatprep.subr.mxu0 0.0
    %635 = vmatpush1.msra.mxu0 0.0
    %636 = vmatprep.subr.mxu0 0.0
    %637 = vmatpush1.msra.mxu0 0.0
    %638 = vmatprep.subr.mxu0 0.0
    %639 = vmatpush1.msra.mxu0 0.0
    %640 = vmatprep.subr.mxu0 0.0
    %641 = vmatpush1.msra.mxu0 0.0
    %642 = vmatprep.subr.mxu0 0.0
    %643 = vmatpush1.msra.mxu0 0.0
    %644 = vmatprep.subr.mxu0 0.0
    %645 = vmatpush1.msra.mxu0 0.0
    %646 = vmatprep.subr.mxu0 0.0
    %647 = vmatpush1.msra.mxu0 0.0
    %648 = vmatprep.subr.mxu0 0.0
    %649 = vmatpush1.msra.mxu0 0.0
    %650 = vmatprep.subr.mxu0 0.0
    %651 = vmatpush1.msra.mxu0 0.0
    %652 = vmatprep.subr.mxu0 0.0
    %653 = vmatpush1.msra.mxu0 0.0
    %654 = vmatprep.subr.mxu0 0.0
    %655 = vmatpush1.msra.mxu0 0.0
    %656 = vmatprep.subr.mxu0 0.0
    %657 = vmatpush1.msra.mxu0 0.0
    %658 = vmatprep.subr.mxu0 0.0
    %659 = vmatpush1.msra.mxu0 0.0
    %660 = vmatprep.subr.mxu0 0.0
    %661 = vmatpush1.msra.mxu0 0.0
    %662 = vmatprep.subr.mxu0 0.0
    %663 = vmatpush1.msra.mxu0 0.0
    %664 = vmatprep.subr.mxu0 0.0
    %665 = vmatpush1.msra.mxu0 0.0
    %666 = vmatprep.subr.mxu0 0.0
    %667 = vmatpush1.msra.mxu0 0.0
    %668 = vmatprep.subr.mxu0 0.0
    %669 = vmatpush1.msra.mxu0 0.0
    %670 = vmatprep.mubr.f32.mxu0 0.0
    %671 = vmatmul.mubr.f32.gmra.mrb[0].mxu0 %v531
    %v672 = vpop.f32.mrb[0].mxu0
    %v673 = vadd.f32 %v603, %v672
    %v674 = vpop.f32.mrb[0].mxu0
    %675 = vdwg.mxu0
    %676 = vst [vmem:[#allocation10] sm:$0x3] %v673
    // Predicated region
    $region34: #{tpu_custom_call.1} parent=1 // pred_check
      _
    $region35: #{tpu_custom_call.1} parent=1 // pred_check_branch
      %678 = sbr.rel (0) target = $region37
    $region36: #{tpu_custom_call.1} parent=1 // pred_region
      %s680 = ssub.s32 32, 32
      %681 = vsyncadd [#allocation4], %s680
      %s683 = sshll.u32 [#allocation10], 4
      %s684 = int_to_ptr.vmem [resolvable:$true] %s683
      %686 = dma.vmem_to_hbm [thread:$0]  %s684, 32, %s4, [#allocation4]
    $region37: #{tpu_custom_call.1} parent=1 // pred_fallthru
      _
    // Predicated region
    $region38: #{tpu_custom_call.1} parent=1 // pred_check
      _
    $region39: #{tpu_custom_call.1} parent=1 // pred_check_branch
      %688 = sbr.rel (0) target = $region41
    $region40: #{tpu_custom_call.1} parent=1 // pred_region
      %689 = dma.done [#allocation4], 32
    $region41: #{tpu_custom_call.1} parent=1 // pred_fallthru
      _
    %690 = vsyncpa [#allocation3], 1
    %691 = vsyncpa [#allocation6], 1
    %692 = vsyncpa [#allocation9], 1
    %693 = vsyncpa [#allocation4], 1

</llo_original>
